<compile_context>
chip_gen: v7x
topology: tpu7x:2x2x1
jax: 0.10.0
libtpu: 0.0.40
codegen_flags: <defaults>
</compile_context>

<pallas_src>
import jax
import jax.numpy as jnp
from jax.experimental import pallas as pl
from jax.experimental.pallas import tpu as pltpu


def _tpl_kernel(a_ref, b_ref, c_ref, x_ref, o_ref):
    f32 = jnp.float32
    a = a_ref[...].astype(f32)
    b = b_ref[...].astype(f32)
    c = c_ref[...].astype(f32)
    x = x_ref[...].astype(f32)
    # sigmoid(z) = 0.5 * (1 + tanh(z / 2))  -> one EUP op (vs exp+add+recip).
    z = a * (x - b)
    sig = 0.5 * (1.0 + jnp.tanh(0.5 * z))
    o_ref[...] = (c + (1.0 - c) * sig).astype(o_ref.dtype)


def tpl_forward(a, b, c, x, *, block_elems=2048 * 128):
    """Elementwise 3PL forward: c + (1 - c) * sigmoid(a * (x - b)).

    All inputs must share one shape and dtype (same semantics as the PyTorch
    module when all operands are full tensors of equal shape).
    """
    assert a.shape == b.shape == c.shape == x.shape
    assert a.dtype == b.dtype == c.dtype == x.dtype
    orig_shape = x.shape
    dtype = x.dtype
    total = int(x.size)

    # Widest lane count that divides the flat size exactly -> lane-dense slab,
    # no padding and no output slice.  Fall back to 128 lanes + a minimal tail
    # pad only when nothing divides cleanly.
    lanes = None
    for cand in (1024, 512, 256, 128):
        if total % cand == 0:
            lanes = cand
            break
    if lanes is None:
        lanes = 128
        padded = pl.cdiv(total, lanes) * lanes
    else:
        padded = total

    def to_slab(v):
        flat = v.reshape(-1)
        if padded != total:
            flat = jnp.pad(flat, (0, padded - total))
        return flat.reshape(padded // lanes, lanes)

    a2, b2, c2, x2 = map(to_slab, (a, b, c, x))
    rows = padded // lanes

    # ~block_elems elements per operand tile (1 MiB for f32 at the default):
    # 5 operands x 2 pipeline buffers ~= 10 MiB VMEM -> safe on v5e/v6e/v7x.
    tr_target = max(8, block_elems // lanes)
    if rows <= tr_target:
        tr = rows                      # full-extent block (always legal)
    else:
        tr = (tr_target // 8) * 8      # sublane-aligned block
    grid = (pl.cdiv(rows, tr),)        # ragged last block handled by Pallas

    spec = pl.BlockSpec((tr, lanes), lambda i: (i, 0))

    out2 = pl.pallas_call(
        _tpl_kernel,
        out_shape=jax.ShapeDtypeStruct((rows, lanes), dtype),
        grid_spec=pltpu.PrefetchScalarGridSpec(
            num_scalar_prefetch=0,
            grid=grid,
            in_specs=[spec, spec, spec, spec],
            out_specs=spec,
        ),
        compiler_params=pltpu.CompilerParams(
            dimension_semantics=("parallel",),
        ),
    )(a2, b2, c2, x2)

    if padded != total:
        return out2.reshape(-1)[:total].reshape(orig_shape)
    return out2.reshape(orig_shape)


def tpl_reference(a, b, c, x):
    return c + (1.0 - c) / (1.0 + jnp.exp(-a * (x - b)))


if __name__ == "__main__":
    key = jax.random.PRNGKey(0)
    k_a, k_b, k_c, k_x = jax.random.split(key, 4)

    # Small NCHW-like shapes: batch=2, channels=4, spatial=16x16.
    shape = (2, 4, 16, 16)
    # a: discrimination (>0), b: difficulty, c: guessing in [0, 0.5), x: ability.
    a = jax.random.uniform(k_a, shape, jnp.float32, 0.5, 2.0)
    b = jax.random.normal(k_b, shape, jnp.float32)
    c = jax.random.uniform(k_c, shape, jnp.float32, 0.0, 0.5)
    x = jax.random.normal(k_x, shape, jnp.float32)

    out = tpl_forward(a, b, c, x)
    out = jax.block_until_ready(out)

    ref = tpl_reference(a, b, c, x)
    assert out.shape == shape
    assert jnp.allclose(out, ref, atol=1e-5, rtol=1e-5), "mismatch vs reference"

    print("KERNEL_OK")
</pallas_src>

<mosaic_0001>
module attributes {stable_mosaic.version = 11 : i64} {
  func.func @_tpl_kernel(%arg0: i32, %arg1: memref<2x1024xf32, #tpu.memory_space<vmem>>, %arg2: memref<2x1024xf32, #tpu.memory_space<vmem>>, %arg3: memref<2x1024xf32, #tpu.memory_space<vmem>>, %arg4: memref<2x1024xf32, #tpu.memory_space<vmem>>, %arg5: memref<2x1024xf32, #tpu.memory_space<vmem>>) attributes {dimension_semantics = [#tpu.dimension_semantics<parallel>], iteration_bounds = array<i64: 1>, scalar_prefetch = 0 : i64, scratch_operands = 0 : i64, tpu.core_type = #tpu.core_type<tc>, window_params = [{transform_indices = @transform_0, window_bounds = array<i64: 2, 1024>}, {transform_indices = @transform_1, window_bounds = array<i64: 2, 1024>}, {transform_indices = @transform_2, window_bounds = array<i64: 2, 1024>}, {transform_indices = @transform_3, window_bounds = array<i64: 2, 1024>}, {transform_indices = @transform_4, window_bounds = array<i64: 2, 1024>}]} {
    %c0 = arith.constant 0 : index
    %c0_0 = arith.constant 0 : index
    %0 = vector.load %arg1[%c0, %c0_0] : memref<2x1024xf32, #tpu.memory_space<vmem>>, vector<2x1024xf32>
    %c0_1 = arith.constant 0 : index
    %c0_2 = arith.constant 0 : index
    %1 = vector.load %arg2[%c0_1, %c0_2] : memref<2x1024xf32, #tpu.memory_space<vmem>>, vector<2x1024xf32>
    %c0_3 = arith.constant 0 : index
    %c0_4 = arith.constant 0 : index
    %2 = vector.load %arg3[%c0_3, %c0_4] : memref<2x1024xf32, #tpu.memory_space<vmem>>, vector<2x1024xf32>
    %c0_5 = arith.constant 0 : index
    %c0_6 = arith.constant 0 : index
    %3 = vector.load %arg4[%c0_5, %c0_6] : memref<2x1024xf32, #tpu.memory_space<vmem>>, vector<2x1024xf32>
    %4 = arith.subf %3, %1 : vector<2x1024xf32>
    %5 = arith.mulf %0, %4 : vector<2x1024xf32>
    %cst = arith.constant 5.000000e-01 : f32
    %6 = vector.broadcast %cst : f32 to vector<2x1024xf32>
    %7 = arith.mulf %6, %5 : vector<2x1024xf32>
    %8 = math.tanh %7 : vector<2x1024xf32>
    %cst_7 = arith.constant 1.000000e+00 : f32
    %9 = vector.broadcast %cst_7 : f32 to vector<2x1024xf32>
    %10 = arith.addf %9, %8 : vector<2x1024xf32>
    %cst_8 = arith.constant 5.000000e-01 : f32
    %11 = vector.broadcast %cst_8 : f32 to vector<2x1024xf32>
    %12 = arith.mulf %11, %10 : vector<2x1024xf32>
    %cst_9 = arith.constant 1.000000e+00 : f32
    %13 = vector.broadcast %cst_9 : f32 to vector<2x1024xf32>
    %14 = arith.subf %13, %2 : vector<2x1024xf32>
    %15 = arith.mulf %14, %12 : vector<2x1024xf32>
    %16 = arith.addf %2, %15 : vector<2x1024xf32>
    %c0_10 = arith.constant 0 : index
    %c0_11 = arith.constant 0 : index
    %17 = vector.load %arg5[%c0_10, %c0_11] : memref<2x1024xf32, #tpu.memory_space<vmem>>, vector<2x1024xf32>
    tpu.vector_store %arg5[%c0_10, %c0_11], %16 {strides = array<i32>} : memref<2x1024xf32, #tpu.memory_space<vmem>>, vector<2x1024xf32>,
    return
  }
  func.func @transform_0(%arg0: i32) -> (i32, i32) {
    %c0_i32 = arith.constant 0 : i32
    %c0_i32_0 = arith.constant 0 : i32
    return %arg0, %c0_i32 : i32, i32
  }
  func.func @transform_1(%arg0: i32) -> (i32, i32) {
    %c0_i32 = arith.constant 0 : i32
    %c0_i32_0 = arith.constant 0 : i32
    return %arg0, %c0_i32 : i32, i32
  }
  func.func @transform_2(%arg0: i32) -> (i32, i32) {
    %c0_i32 = arith.constant 0 : i32
    %c0_i32_0 = arith.constant 0 : i32
    return %arg0, %c0_i32 : i32, i32
  }
  func.func @transform_3(%arg0: i32) -> (i32, i32) {
    %c0_i32 = arith.constant 0 : i32
    %c0_i32_0 = arith.constant 0 : i32
    return %arg0, %c0_i32 : i32, i32
  }
  func.func @transform_4(%arg0: i32) -> (i32, i32) {
    %c0_i32 = arith.constant 0 : i32
    %c0_i32_0 = arith.constant 0 : i32
    return %arg0, %c0_i32 : i32, i32
  }
}

</mosaic_0001>

<llo_original>
// kernel: tpu_custom_call.1
$region0: #{tpu_custom_call.1}
  #allocation0 [shape = 'u32[]', space=smem, size = 0x4, offset = 0x4, fixed_abs, tag = 'smem constant byte address 0x4 - core index']
  #allocation1 [shape = 'u32[144,128]{1,0:T(1,128)}', space=vmem, size = 0x12000, scoped, tag = 'internal scratch']
  %s0 = inlined_call_operand.hbm [shape: f32[2,1024], index: 0, kind: input, shape index: {}]
  %s1 = inlined_call_operand.hbm [shape: f32[2,1024], index: 1, kind: input, shape index: {}]
  %s2 = inlined_call_operand.hbm [shape: f32[2,1024], index: 2, kind: input, shape index: {}]
  %s3 = inlined_call_operand.hbm [shape: f32[2,1024], index: 3, kind: input, shape index: {}]
  %s4 = inlined_call_operand.hbm [shape: f32[2,1024], index: 4, kind: output, shape index: {}]
  %s5 = sld [smem:[#allocation0]]
  $region42: #{tpu_custom_call.1} parent=0
    _
  %s7 = ssub.s32 1, %s5
  %s8 = scalar_select 0, %s7, %s5
  $region1: #{tpu_custom_call.1} parent=0
    #allocation2 [shape = 'u8[8192]{0}', space=vmem, size = 0x2000, scoped, tag = 'input window, operand 0, single buffered']
    #allocation3 [shape = 's32[1]{0}', space=sflag, size = 0x4, scoped, tag = 'scoped memory for tpu_custom_call.1']
    #allocation4 [shape = 's32[1]{0}', space=sflag, size = 0x4, scoped, tag = 'scoped memory for tpu_custom_call.1']
    #allocation5 [shape = 'u8[8192]{0}', space=vmem, size = 0x2000, scoped, tag = 'input window, operand 1, single buffered']
    #allocation6 [shape = 's32[1]{0}', space=sflag, size = 0x4, scoped, tag = 'scoped memory for tpu_custom_call.1']
    #allocation7 [shape = 'u8[8192]{0}', space=vmem, size = 0x2000, scoped, tag = 'input window, operand 2, single buffered']
    #allocation8 [shape = 'u8[8192]{0}', space=vmem, size = 0x2000, scoped, tag = 'input window, operand 3, single buffered']
    #allocation9 [shape = 's32[1]{0}', space=sflag, size = 0x4, scoped, tag = 'scoped memory for tpu_custom_call.1']
    #allocation10 [shape = 'u8[8192]{0}', space=vmem, size = 0x2000, scoped, tag = 'output window, operand 0, single buffered']
    %9 = vsyncpa [#allocation3], 0
    %10 = vsyncpa [#allocation6], 0
    %11 = vsyncpa [#allocation9], 0
    %12 = vsyncpa [#allocation4], 0
    // Predicated region
    $region2: #{tpu_custom_call.1} parent=1 // pred_check
      _
    $region3: #{tpu_custom_call.1} parent=1 // pred_check_branch
      %14 = sbr.rel (0) target = $region5
    $region4: #{tpu_custom_call.1} parent=1 // pred_region
      %s16 = ssub.s32 256, 256
      %17 = vsyncadd [#allocation3], %s16
      %s19 = sshll.u32 [#allocation2], 4
      %s20 = int_to_ptr.vmem [resolvable:$true] %s19
      %22 = dma.hbm_to_vmem [thread:$0]  %s0, 256, %s20, [#allocation3]
    $region5: #{tpu_custom_call.1} parent=1 // pred_fallthru
      _
    // Predicated region
    $region6: #{tpu_custom_call.1} parent=1 // pred_check
      _
    $region7: #{tpu_custom_call.1} parent=1 // pred_check_branch
      %24 = sbr.rel (0) target = $region9
    $region8: #{tpu_custom_call.1} parent=1 // pred_region
      %s26 = ssub.s32 256, 256
      %27 = vsyncadd [#allocation6], %s26
      %s29 = sshll.u32 [#allocation5], 4
      %s30 = int_to_ptr.vmem [resolvable:$true] %s29
      %32 = dma.hbm_to_vmem [thread:$0]  %s1, 256, %s30, [#allocation6]
    $region9: #{tpu_custom_call.1} parent=1 // pred_fallthru
      _
    // Predicated region
    $region10: #{tpu_custom_call.1} parent=1 // pred_check
      _
    $region11: #{tpu_custom_call.1} parent=1 // pred_check_branch
      %34 = sbr.rel (0) target = $region13
    $region12: #{tpu_custom_call.1} parent=1 // pred_region
      %s36 = ssub.s32 256, 256
      %37 = vsyncadd [#allocation6], %s36
      %s39 = sshll.u32 [#allocation7], 4
      %s40 = int_to_ptr.vmem [resolvable:$true] %s39
      %42 = dma.hbm_to_vmem [thread:$0]  %s2, 256, %s40, [#allocation6]
    $region13: #{tpu_custom_call.1} parent=1 // pred_fallthru
      _
    // Predicated region
    $region14: #{tpu_custom_call.1} parent=1 // pred_check
      _
    $region15: #{tpu_custom_call.1} parent=1 // pred_check_branch
      %44 = sbr.rel (0) target = $region17
    $region16: #{tpu_custom_call.1} parent=1 // pred_region
      %s46 = ssub.s32 256, 256
      %47 = vsyncadd [#allocation9], %s46
      %s49 = sshll.u32 [#allocation8], 4
      %s50 = int_to_ptr.vmem [resolvable:$true] %s49
      %52 = dma.hbm_to_vmem [thread:$0]  %s3, 256, %s50, [#allocation9]
    $region17: #{tpu_custom_call.1} parent=1 // pred_fallthru
      _
    // Predicated region
    $region18: #{tpu_custom_call.1} parent=1 // pred_check
      _
    $region19: #{tpu_custom_call.1} parent=1 // pred_check_branch
      %54 = sbr.rel (0) target = $region21
    $region20: #{tpu_custom_call.1} parent=1 // pred_region
      %55 = dma.done [#allocation3], 256
    $region21: #{tpu_custom_call.1} parent=1 // pred_fallthru
      _
    // Predicated region
    $region22: #{tpu_custom_call.1} parent=1 // pred_check
      _
    $region23: #{tpu_custom_call.1} parent=1 // pred_check_branch
      %57 = sbr.rel (0) target = $region25
    $region24: #{tpu_custom_call.1} parent=1 // pred_region
      %58 = dma.done [#allocation6], 256
    $region25: #{tpu_custom_call.1} parent=1 // pred_fallthru
      _
    // Predicated region
    $region26: #{tpu_custom_call.1} parent=1 // pred_check
      _
    $region27: #{tpu_custom_call.1} parent=1 // pred_check_branch
      %60 = sbr.rel (0) target = $region29
    $region28: #{tpu_custom_call.1} parent=1 // pred_region
      %61 = dma.done [#allocation6], 256
    $region29: #{tpu_custom_call.1} parent=1 // pred_fallthru
      _
    // Predicated region
    $region30: #{tpu_custom_call.1} parent=1 // pred_check
      _
    $region31: #{tpu_custom_call.1} parent=1 // pred_check_branch
      %63 = sbr.rel (0) target = $region33
    $region32: #{tpu_custom_call.1} parent=1 // pred_region
      %64 = dma.done [#allocation9], 256
    $region33: #{tpu_custom_call.1} parent=1 // pred_fallthru
      _
    %v65 = vld [vmem:[#allocation2] sm:$0xff]
    %v66 = vld [vmem:[#allocation2 + $0x8] sm:$0xff]
    %v67 = vld [vmem:[#allocation5] sm:$0xff]
    %v68 = vld [vmem:[#allocation5 + $0x8] sm:$0xff]
    %v69 = vld [vmem:[#allocation7] sm:$0xff]
    %v70 = vld [vmem:[#allocation7 + $0x8] sm:$0xff]
    %v71 = vld [vmem:[#allocation8] sm:$0xff]
    %v72 = vld [vmem:[#allocation8 + $0x8] sm:$0xff]
    %v73 = vsub.f32 %v71, %v67
    %v74 = vsub.f32 %v72, %v68
    %v75 = vmul.f32 %v65, %v73
    %v76 = vmul.f32 %v66, %v74
    %v77 = vmul.f32 %v75, 0.5
    %v78 = vmul.f32 %v76, 0.5
    %v79 = vtanh.pop %v77
    %v80 = vtanh.pop %v78
    %v81 = vadd.f32 %v79, 1.0
    %v82 = vadd.f32 %v80, 1.0
    %v83 = vmul.f32 %v81, 0.5
    %v84 = vmul.f32 %v82, 0.5
    %v85 = vsub.f32 1.0, %v69
    %v86 = vsub.f32 1.0, %v70
    %v87 = vmul.f32 %v85, %v83
    %v88 = vmul.f32 %v86, %v84
    %v89 = vadd.f32 %v69, %v87
    %v90 = vadd.f32 %v70, %v88
    %91 = vst [vmem:[#allocation10] sm:$0xff] %v89
    %92 = vst [vmem:[#allocation10 + $0x8] sm:$0xff] %v90
    // Predicated region
    $region34: #{tpu_custom_call.1} parent=1 // pred_check
      _
    $region35: #{tpu_custom_call.1} parent=1 // pred_check_branch
      %94 = sbr.rel (0) target = $region37
    $region36: #{tpu_custom_call.1} parent=1 // pred_region
      %s96 = ssub.s32 256, 256
      %97 = vsyncadd [#allocation4], %s96
      %s99 = sshll.u32 [#allocation10], 4
      %s100 = int_to_ptr.vmem [resolvable:$true] %s99
      %102 = dma.vmem_to_hbm [thread:$0]  %s100, 256, %s4, [#allocation4]
    $region37: #{tpu_custom_call.1} parent=1 // pred_fallthru
      _
    // Predicated region
    $region38: #{tpu_custom_call.1} parent=1 // pred_check
      _
    $region39: #{tpu_custom_call.1} parent=1 // pred_check_branch
      %104 = sbr.rel (0) target = $region41
    $region40: #{tpu_custom_call.1} parent=1 // pred_region
      %105 = dma.done [#allocation4], 256
    $region41: #{tpu_custom_call.1} parent=1 // pred_fallthru
      _
    %106 = vsyncpa [#allocation3], 1
    %107 = vsyncpa [#allocation6], 1
    %108 = vsyncpa [#allocation9], 1
    %109 = vsyncpa [#allocation4], 1

</llo_original>
